<compile_context>
chip_gen: v7x
topology: tpu7x:2x2x1
jax: 0.10.0
libtpu: 0.0.40
codegen_flags: <defaults>
</compile_context>

<pallas_src>
import functools

import jax
import jax.numpy as jnp
from jax import lax
from jax.experimental import pallas as pl
from jax.experimental.pallas import tpu as pltpu


def _round_up(a, b):
    return ((a + b - 1) // b) * b


def _forget_mult_kernel(h0_ref, f_ref, x_ref, o_ref, carry_ref, *, t_blk, t_scan):
    """One grid step == t_blk timesteps of the recurrence on one lane block.

    h0_ref   : (1, N_BLK)      initial hidden state slice for this lane block
    f_ref    : (T_BLK, N_BLK)  forget gates for this time block
    x_ref    : (T_BLK, N_BLK)  inputs for this time block
    o_ref    : (T_BLK, N_BLK)  outputs h_t
    carry_ref: VMEM (1, N_BLK) f32 scratch carrying h_{t-1} across time blocks
    """
    t = pl.program_id(1)

    # Re-initialize the carry at the start of every lane block's time sweep.
    @pl.when(t == 0)
    def _():
        carry_ref[...] = h0_ref[...].astype(jnp.float32)

    # Static shift amounts and sublane-index masks for the Hillis-Steele scan.
    shifts = []
    k = 1
    while k < t_scan:
        shifts.append(k)
        k *= 2
    row = lax.broadcasted_iota(jnp.int32, (t_scan, 1), 0)
    masks = [row >= s for s in shifts]       # hoisted out of the sub-block loop

    n_sub = t_blk // t_scan
    for j in range(n_sub):
        r0 = j * t_scan
        rows = pl.ds(r0, t_scan)

        # h_{t-1} entering this sub-block: (1, N_BLK), broadcast over sublanes.
        if j == 0:
            h_prev = carry_ref[...]                                   # f32
        else:
            h_prev = o_ref[pl.ds(r0 - 1, 1), :].astype(jnp.float32)

        f_blk = f_ref[rows, :].astype(jnp.float32)
        x_blk = x_ref[rows, :].astype(jnp.float32)

        # h_t = a_t * h_{t-1} + b_t
        a = 1.0 - f_blk
        b = f_blk * x_blk

        # Inclusive scan along time with combine
        #   (A1,B1) then (A2,B2)  ->  (A2*A1, A2*B1 + B2)
        # Identity element is (1, 0) for rows that would wrap around the roll.
        for s, mask in zip(shifts, masks):
            a_prev = jnp.where(mask, pltpu.roll(a, shift=s, axis=0), 1.0)
            b_prev = jnp.where(mask, pltpu.roll(b, shift=s, axis=0), 0.0)
            b = a * b_prev + b        # uses old `a`
            a = a * a_prev

        # Apply the composed transform to the incoming hidden state.
        h_blk = a * h_prev + b        # (T_SCAN, N_BLK); h_prev broadcasts over rows
        o_ref[rows, :] = h_blk.astype(o_ref.dtype)

    # Carry the last timestep of this block into the next grid step.
    carry_ref[...] = o_ref[pl.ds(t_blk - 1, 1), :].astype(jnp.float32)


def forget_mult(f, x, hidden_init=None):
    """ForgetMult forward: f, x of shape (S, B, H); optional hidden_init (B, H)."""
    S, B, H = f.shape
    dtype = f.dtype
    if hidden_init is None:
        hidden_init = jnp.zeros((B, H), dtype=dtype)
    hidden_init = hidden_init.astype(dtype)

    itemsize = jnp.dtype(dtype).itemsize
    sub = max(8, 32 // itemsize)              # sublane granularity: 8 (f32), 16 (bf16)

    # ---- lane-dense flattening: (S, B, H) -> (S, B*H), lanes padded to mult. of 128
    n_raw = B * H
    lanes = _round_up(n_raw, 128)
    m = lanes // 128
    # largest multiple-of-128 divisor of the padded lane count, capped at 2048 lanes
    d = max(dd for dd in range(1, min(m, 16) + 1) if m % dd == 0)
    n_blk = 128 * d
    grid_n = lanes // n_blk

    # ---- time blocking: scan length per sub-block and rows per grid step
    t_scan = min(32, _round_up(S, sub))       # scan length (VPU work ~ log2(t_scan))
    s_r = _round_up(S, t_scan)
    row_bytes = n_blk * itemsize
    rows_target = max(t_scan,
                      min(512, _round_up(max((2 << 20) // row_bytes, 1), t_scan)))
    grid_t = -(-s_r // rows_target)
    t_blk = _round_up(-(-s_r // grid_t), t_scan)
    s_pad = t_blk * grid_t

    f2 = f.reshape(S, n_raw)
    x2 = x.reshape(S, n_raw)
    h02 = hidden_init.reshape(1, n_raw)
    if s_pad != S or lanes != n_raw:
        # f = 0 in padding keeps h unchanged; padded rows/lanes are sliced off below.
        f2 = jnp.pad(f2, ((0, s_pad - S), (0, lanes - n_raw)))
        x2 = jnp.pad(x2, ((0, s_pad - S), (0, lanes - n_raw)))
    if lanes != n_raw:
        h02 = jnp.pad(h02, ((0, 0), (0, lanes - n_raw)))

    kernel = functools.partial(_forget_mult_kernel, t_blk=t_blk, t_scan=t_scan)

    grid_spec = pltpu.PrefetchScalarGridSpec(
        num_scalar_prefetch=0,
        grid=(grid_n, grid_t),
        in_specs=[
            pl.BlockSpec((1, n_blk), lambda n, t: (0, n)),       # h0 (per lane block)
            pl.BlockSpec((t_blk, n_blk), lambda n, t: (t, n)),   # f
            pl.BlockSpec((t_blk, n_blk), lambda n, t: (t, n)),   # x
        ],
        out_specs=pl.BlockSpec((t_blk, n_blk), lambda n, t: (t, n)),
        scratch_shapes=[pltpu.VMEM((1, n_blk), jnp.float32)],
    )

    out = pl.pallas_call(
        kernel,
        out_shape=jax.ShapeDtypeStruct((s_pad, lanes), dtype),
        grid_spec=grid_spec,
        compiler_params=pltpu.CompilerParams(
            # lane blocks are independent -> "parallel" (v7x megacore);
            # time is a strict recurrence -> "arbitrary"
            dimension_semantics=("parallel", "arbitrary"),
            vmem_limit_bytes=48 * 1024 * 1024,
        ),
    )(h02, f2, x2)

    return out[:S, :n_raw].reshape(S, B, H)


def _forget_mult_ref(f, x, hidden_init=None):
    """Pure-JAX reference (mirrors CPUForgetMult)."""
    _, B, H = f.shape
    h0 = jnp.zeros((B, H), f.dtype) if hidden_init is None else hidden_init

    def step(h_prev, ft_xt):
        ft, xt = ft_xt
        h = ft * xt + (1.0 - ft) * h_prev
        return h, h

    _, hs = lax.scan(step, h0, (f, x))
    return hs


if __name__ == "__main__":
    key = jax.random.PRNGKey(0)
    kf, kx, kh, kf3, kx3, kh3 = jax.random.split(key, 6)

    # Cases 1 & 2: canonical small shape (seq=8, batch=2, hidden=32).
    S, B, H = 8, 2, 32
    f = jax.nn.sigmoid(jax.random.normal(kf, (S, B, H), dtype=jnp.float32))
    x = jax.random.normal(kx, (S, B, H), dtype=jnp.float32)
    h0 = jax.random.normal(kh, (B, H), dtype=jnp.float32)

    out1 = jax.block_until_ready(forget_mult(f, x))          # no hidden_init (zeros)
    ref1 = _forget_mult_ref(f, x)
    out2 = jax.block_until_ready(forget_mult(f, x, h0))      # with hidden_init
    ref2 = _forget_mult_ref(f, x, h0)

    assert out1.shape == (S, B, H) and out1.dtype == f.dtype
    assert jnp.allclose(out1, ref1, atol=1e-4, rtol=1e-4)
    assert jnp.allclose(out2, ref2, atol=1e-4, rtol=1e-4)

    # Case 3: odd shape exercising time/lane padding and multiple scan sub-blocks.
    S3, B3, H3 = 70, 3, 50
    f3 = jax.nn.sigmoid(jax.random.normal(kf3, (S3, B3, H3), dtype=jnp.float32))
    x3 = jax.random.normal(kx3, (S3, B3, H3), dtype=jnp.float32)
    h03 = jax.random.normal(kh3, (B3, H3), dtype=jnp.float32)
    out3 = jax.block_until_ready(forget_mult(f3, x3, h03))
    ref3 = _forget_mult_ref(f3, x3, h03)
    assert jnp.allclose(out3, ref3, atol=1e-4, rtol=1e-4)

    print("KERNEL_OK")
</pallas_src>

<mosaic_0001>
module attributes {stable_mosaic.version = 11 : i64} {
  func.func @_forget_mult_kernel(%arg0: i32, %arg1: i32, %arg2: memref<1x128xf32, #tpu.memory_space<vmem>>, %arg3: memref<8x128xf32, #tpu.memory_space<vmem>>, %arg4: memref<8x128xf32, #tpu.memory_space<vmem>>, %arg5: memref<8x128xf32, #tpu.memory_space<vmem>>, %arg6: memref<1x128xf32, #tpu.memory_space<vmem>>) attributes {dimension_semantics = [#tpu.dimension_semantics<parallel>, #tpu.dimension_semantics<arbitrary>], iteration_bounds = array<i64: 1, 1>, scalar_prefetch = 0 : i64, scratch_operands = 1 : i64, tpu.core_type = #tpu.core_type<tc>, window_params = [{transform_indices = @transform_0, window_bounds = array<i64: 1, 128>}, {transform_indices = @transform_1, window_bounds = array<i64: 8, 128>}, {transform_indices = @transform_2, window_bounds = array<i64: 8, 128>}, {transform_indices = @transform_3, window_bounds = array<i64: 8, 128>}]} {
    %c0_i32 = arith.constant 0 : i32
    %0 = arith.cmpi eq, %arg1, %c0_i32 : i32
    %1 = arith.extui %0 : i1 to i32
    %c0_i32_0 = arith.constant 0 : i32
    %2 = arith.cmpi ne, %1, %c0_i32_0 : i32
    scf.if %2 {
      %c0_23 = arith.constant 0 : index
      %c0_24 = arith.constant 0 : index
      %61 = vector.load %arg2[%c0_23, %c0_24] : memref<1x128xf32, #tpu.memory_space<vmem>>, vector<1x128xf32>
      %c0_25 = arith.constant 0 : index
      %c0_26 = arith.constant 0 : index
      %62 = vector.load %arg6[%c0_25, %c0_26] : memref<1x128xf32, #tpu.memory_space<vmem>>, vector<1x128xf32>
      tpu.vector_store %arg6[%c0_25, %c0_26], %61 {strides = array<i32>} : memref<1x128xf32, #tpu.memory_space<vmem>>, vector<1x128xf32>,
    } else {
    }
    %3 = tpu.iota {dimensions = array<i32: 0>} : vector<8x1xi32>
    %c1_i32 = arith.constant 1 : i32
    %4 = vector.broadcast %c1_i32 : i32 to vector<8x1xi32>
    %5 = arith.cmpi sge, %3, %4 : vector<8x1xi32>
    %c2_i32 = arith.constant 2 : i32
    %6 = vector.broadcast %c2_i32 : i32 to vector<8x1xi32>
    %7 = arith.cmpi sge, %3, %6 : vector<8x1xi32>
    %c4_i32 = arith.constant 4 : i32
    %8 = vector.broadcast %c4_i32 : i32 to vector<8x1xi32>
    %9 = arith.cmpi sge, %3, %8 : vector<8x1xi32>
    %c0 = arith.constant 0 : index
    %c0_1 = arith.constant 0 : index
    %10 = vector.load %arg6[%c0, %c0_1] : memref<1x128xf32, #tpu.memory_space<vmem>>, vector<1x128xf32>
    %c0_2 = arith.constant 0 : index
    %c0_3 = arith.constant 0 : index
    %11 = vector.load %arg3[%c0_2, %c0_3] : memref<8x128xf32, #tpu.memory_space<vmem>>, vector<8x128xf32>
    %c0_4 = arith.constant 0 : index
    %c0_5 = arith.constant 0 : index
    %12 = vector.load %arg4[%c0_4, %c0_5] : memref<8x128xf32, #tpu.memory_space<vmem>>, vector<8x128xf32>
    %cst = arith.constant 1.000000e+00 : f32
    %13 = vector.broadcast %cst : f32 to vector<8x128xf32>
    %14 = arith.subf %13, %11 : vector<8x128xf32>
    %15 = arith.mulf %11, %12 : vector<8x128xf32>
    %c1_i32_6 = arith.constant 1 : i32
    %16 = tpu.dynamic_rotate %14 by %c1_i32_6 dim 0 : vector<8x128xf32>, i32 -> vector<8x128xf32>
    %cst_7 = arith.constant 1.000000e+00 : f32
    %17 = vector.shape_cast %5 : vector<8x1xi1> to vector<8x1xi1>
    %18 = vector.broadcast %17 : vector<8x1xi1> to vector<8x128xi1>
    %19 = vector.broadcast %cst_7 : f32 to vector<8x128xf32>
    %20 = arith.select %18, %16, %19 : vector<8x128xi1>, vector<8x128xf32>
    %c1_i32_8 = arith.constant 1 : i32
    %21 = tpu.dynamic_rotate %15 by %c1_i32_8 dim 0 : vector<8x128xf32>, i32 -> vector<8x128xf32>
    %cst_9 = arith.constant 0.000000e+00 : f32
    %22 = vector.shape_cast %5 : vector<8x1xi1> to vector<8x1xi1>
    %23 = vector.broadcast %22 : vector<8x1xi1> to vector<8x128xi1>
    %24 = vector.broadcast %cst_9 : f32 to vector<8x128xf32>
    %25 = arith.select %23, %21, %24 : vector<8x128xi1>, vector<8x128xf32>
    %26 = arith.mulf %14, %25 : vector<8x128xf32>
    %27 = arith.addf %26, %15 : vector<8x128xf32>
    %28 = arith.mulf %14, %20 : vector<8x128xf32>
    %c2_i32_10 = arith.constant 2 : i32
    %29 = tpu.dynamic_rotate %28 by %c2_i32_10 dim 0 : vector<8x128xf32>, i32 -> vector<8x128xf32>
    %cst_11 = arith.constant 1.000000e+00 : f32
    %30 = vector.shape_cast %7 : vector<8x1xi1> to vector<8x1xi1>
    %31 = vector.broadcast %30 : vector<8x1xi1> to vector<8x128xi1>
    %32 = vector.broadcast %cst_11 : f32 to vector<8x128xf32>
    %33 = arith.select %31, %29, %32 : vector<8x128xi1>, vector<8x128xf32>
    %c2_i32_12 = arith.constant 2 : i32
    %34 = tpu.dynamic_rotate %27 by %c2_i32_12 dim 0 : vector<8x128xf32>, i32 -> vector<8x128xf32>
    %cst_13 = arith.constant 0.000000e+00 : f32
    %35 = vector.shape_cast %7 : vector<8x1xi1> to vector<8x1xi1>
    %36 = vector.broadcast %35 : vector<8x1xi1> to vector<8x128xi1>
    %37 = vector.broadcast %cst_13 : f32 to vector<8x128xf32>
    %38 = arith.select %36, %34, %37 : vector<8x128xi1>, vector<8x128xf32>
    %39 = arith.mulf %28, %38 : vector<8x128xf32>
    %40 = arith.addf %39, %27 : vector<8x128xf32>
    %41 = arith.mulf %28, %33 : vector<8x128xf32>
    %c4_i32_14 = arith.constant 4 : i32
    %42 = tpu.dynamic_rotate %41 by %c4_i32_14 dim 0 : vector<8x128xf32>, i32 -> vector<8x128xf32>
    %cst_15 = arith.constant 1.000000e+00 : f32
    %43 = vector.shape_cast %9 : vector<8x1xi1> to vector<8x1xi1>
    %44 = vector.broadcast %43 : vector<8x1xi1> to vector<8x128xi1>
    %45 = vector.broadcast %cst_15 : f32 to vector<8x128xf32>
    %46 = arith.select %44, %42, %45 : vector<8x128xi1>, vector<8x128xf32>
    %c4_i32_16 = arith.constant 4 : i32
    %47 = tpu.dynamic_rotate %40 by %c4_i32_16 dim 0 : vector<8x128xf32>, i32 -> vector<8x128xf32>
    %cst_17 = arith.constant 0.000000e+00 : f32
    %48 = vector.shape_cast %9 : vector<8x1xi1> to vector<8x1xi1>
    %49 = vector.broadcast %48 : vector<8x1xi1> to vector<8x128xi1>
    %50 = vector.broadcast %cst_17 : f32 to vector<8x128xf32>
    %51 = arith.select %49, %47, %50 : vector<8x128xi1>, vector<8x128xf32>
    %52 = arith.mulf %41, %51 : vector<8x128xf32>
    %53 = arith.addf %52, %40 : vector<8x128xf32>
    %54 = arith.mulf %41, %46 : vector<8x128xf32>
    %55 = vector.broadcast %10 : vector<1x128xf32> to vector<8x128xf32>
    %56 = arith.mulf %54, %55 : vector<8x128xf32>
    %57 = arith.addf %56, %53 : vector<8x128xf32>
    %c0_18 = arith.constant 0 : index
    %c0_19 = arith.constant 0 : index
    %58 = vector.load %arg5[%c0_18, %c0_19] : memref<8x128xf32, #tpu.memory_space<vmem>>, vector<8x128xf32>
    tpu.vector_store %arg5[%c0_18, %c0_19], %57 {strides = array<i32>} : memref<8x128xf32, #tpu.memory_space<vmem>>, vector<8x128xf32>,
    %c7 = arith.constant 7 : index
    %c0_20 = arith.constant 0 : index
    %59 = vector.load %arg5[%c7, %c0_20] : memref<8x128xf32, #tpu.memory_space<vmem>>, vector<1x128xf32>
    %c0_21 = arith.constant 0 : index
    %c0_22 = arith.constant 0 : index
    %60 = vector.load %arg6[%c0_21, %c0_22] : memref<1x128xf32, #tpu.memory_space<vmem>>, vector<1x128xf32>
    tpu.vector_store %arg6[%c0_21, %c0_22], %59 {strides = array<i32>} : memref<1x128xf32, #tpu.memory_space<vmem>>, vector<1x128xf32>,
    return
  }
  func.func @transform_0(%arg0: i32, %arg1: i32) -> (i32, i32) {
    %c0_i32 = arith.constant 0 : i32
    %c0_i32_0 = arith.constant 0 : i32
    return %c0_i32, %arg0 : i32, i32
  }
  func.func @transform_1(%arg0: i32, %arg1: i32) -> (i32, i32) {
    %c0_i32 = arith.constant 0 : i32
    return %arg1, %arg0 : i32, i32
  }
  func.func @transform_2(%arg0: i32, %arg1: i32) -> (i32, i32) {
    %c0_i32 = arith.constant 0 : i32
    return %arg1, %arg0 : i32, i32
  }
  func.func @transform_3(%arg0: i32, %arg1: i32) -> (i32, i32) {
    %c0_i32 = arith.constant 0 : i32
    return %arg1, %arg0 : i32, i32
  }
}

</mosaic_0001>

<llo_original>
// kernel: tpu_custom_call.1
$region0: #{tpu_custom_call.1}
  #allocation0 [shape = 'u32[]', space=smem, size = 0x4, offset = 0x4, fixed_abs, tag = 'smem constant byte address 0x4 - core index']
  #allocation1 [shape = 'u32[144,128]{1,0:T(1,128)}', space=vmem, size = 0x12000, scoped, tag = 'internal scratch']
  #allocation2 [shape = 'f32[1,128]{1,0:T(1,128)}', space=vmem, size = 0x200, scoped, tag = 'scratch operand']
  %s0 = inlined_call_operand.hbm [shape: f32[1,128], index: 0, kind: input, shape index: {}]
  %s1 = inlined_call_operand.hbm [shape: f32[8,128], index: 1, kind: input, shape index: {}]
  %s2 = inlined_call_operand.hbm [shape: f32[8,128], index: 2, kind: input, shape index: {}]
  %s3 = inlined_call_operand.hbm [shape: f32[8,128], index: 3, kind: output, shape index: {}]
  %s4 = sld [smem:[#allocation0]]
  $region38: #{tpu_custom_call.1} parent=0
    _
  %s6 = ssub.s32 1, %s4
  %s7 = scalar_select 0, %s6, %s4
  $region1: #{tpu_custom_call.1} parent=0
    #allocation3 [shape = 'u8[512]{0}', space=vmem, size = 0x400, scoped, tag = 'input window, operand 0, single buffered']
    #allocation4 [shape = 's32[1]{0}', space=sflag, size = 0x4, scoped, tag = 'scoped memory for tpu_custom_call.1']
    #allocation5 [shape = 's32[1]{0}', space=sflag, size = 0x4, scoped, tag = 'scoped memory for tpu_custom_call.1']
    #allocation6 [shape = 'u8[4096]{0}', space=vmem, size = 0x1000, scoped, tag = 'input window, operand 1, single buffered']
    #allocation7 [shape = 's32[1]{0}', space=sflag, size = 0x4, scoped, tag = 'scoped memory for tpu_custom_call.1']
    #allocation8 [shape = 'u8[4096]{0}', space=vmem, size = 0x1000, scoped, tag = 'input window, operand 2, single buffered']
    #allocation9 [shape = 'u8[4096]{0}', space=vmem, size = 0x1000, scoped, tag = 'output window, operand 0, single buffered']
    %8 = vsyncpa [#allocation4], 0
    %9 = vsyncpa [#allocation7], 0
    %10 = vsyncpa [#allocation5], 0
    // Predicated region
    $region2: #{tpu_custom_call.1} parent=1 // pred_check
      _
    $region3: #{tpu_custom_call.1} parent=1 // pred_check_branch
      %12 = sbr.rel (0) target = $region5
    $region4: #{tpu_custom_call.1} parent=1 // pred_region
      %s14 = ssub.s32 16, 16
      %15 = vsyncadd [#allocation4], %s14
      %s17 = sshll.u32 [#allocation3], 4
      %s18 = int_to_ptr.vmem [resolvable:$true] %s17
      %20 = dma.hbm_to_vmem [thread:$0]  %s0, 16, %s18, [#allocation4]
    $region5: #{tpu_custom_call.1} parent=1 // pred_fallthru
      _
    // Predicated region
    $region6: #{tpu_custom_call.1} parent=1 // pred_check
      _
    $region7: #{tpu_custom_call.1} parent=1 // pred_check_branch
      %22 = sbr.rel (0) target = $region9
    $region8: #{tpu_custom_call.1} parent=1 // pred_region
      %s24 = ssub.s32 128, 128
      %25 = vsyncadd [#allocation7], %s24
      %s27 = sshll.u32 [#allocation6], 4
      %s28 = int_to_ptr.vmem [resolvable:$true] %s27
      %30 = dma.hbm_to_vmem [thread:$0]  %s1, 128, %s28, [#allocation7]
    $region9: #{tpu_custom_call.1} parent=1 // pred_fallthru
      _
    // Predicated region
    $region10: #{tpu_custom_call.1} parent=1 // pred_check
      _
    $region11: #{tpu_custom_call.1} parent=1 // pred_check_branch
      %32 = sbr.rel (0) target = $region13
    $region12: #{tpu_custom_call.1} parent=1 // pred_region
      %s34 = ssub.s32 128, 128
      %35 = vsyncadd [#allocation7], %s34
      %s37 = sshll.u32 [#allocation8], 4
      %s38 = int_to_ptr.vmem [resolvable:$true] %s37
      %40 = dma.hbm_to_vmem [thread:$0]  %s2, 128, %s38, [#allocation7]
    $region13: #{tpu_custom_call.1} parent=1 // pred_fallthru
      _
    // Predicated region
    $region14: #{tpu_custom_call.1} parent=1 // pred_check
      _
    $region15: #{tpu_custom_call.1} parent=1 // pred_check_branch
      %42 = sbr.rel (0) target = $region17
    $region16: #{tpu_custom_call.1} parent=1 // pred_region
      %43 = dma.done [#allocation4], 16
    $region17: #{tpu_custom_call.1} parent=1 // pred_fallthru
      _
    // Predicated region
    $region18: #{tpu_custom_call.1} parent=1 // pred_check
      _
    $region19: #{tpu_custom_call.1} parent=1 // pred_check_branch
      %45 = sbr.rel (0) target = $region21
    $region20: #{tpu_custom_call.1} parent=1 // pred_region
      %46 = dma.done [#allocation7], 128
    $region21: #{tpu_custom_call.1} parent=1 // pred_fallthru
      _
    // Predicated region
    $region22: #{tpu_custom_call.1} parent=1 // pred_check
      _
    $region23: #{tpu_custom_call.1} parent=1 // pred_check_branch
      %48 = sbr.rel (0) target = $region25
    $region24: #{tpu_custom_call.1} parent=1 // pred_region
      %49 = dma.done [#allocation7], 128
    $region25: #{tpu_custom_call.1} parent=1 // pred_fallthru
      _
    %p50 = scmp.eq.s32.totalorder 0, 0
    // Predicated region
    $region26: #{tpu_custom_call.1} parent=1 // pred_check
      %p51 = pneg %p50
    $region27: #{tpu_custom_call.1} parent=1 // pred_check_branch
      %53 = sbr.rel (%p51) target = $region29
    $region28: #{tpu_custom_call.1} parent=1 // pred_region
      %v54 = vld [vmem:[#allocation3] sm:$0x1]
      %55 = vst [vmem:[#allocation2] sm:$0x1] %v54
    $region29: #{tpu_custom_call.1} parent=1 // pred_fallthru
      _
    %v56 = vlaneseq
    %v57 = vshrl.u32 %v56, 7
    %vm58 = vcmp.ge.s32.totalorder %v57, 1
    %vm59 = vcmp.ge.s32.totalorder %v57, 2
    %vm60 = vcmp.ge.s32.totalorder %v57, 4
    %v61 = vld [vmem:[#allocation2] sm:$0x1]
    %v62 = vld [vmem:[#allocation6] sm:$0xff]
    %v63 = vld [vmem:[#allocation8] sm:$0xff]
    %v64 = vsub.f32 1.0, %v62
    %v65 = vmul.f32 %v62, %v63
    %v66 = vrot.slane %v64, 7
    %v67 = vsel %vm58, 1, 0
    %vm68 = vcmp.eq.s32.totalorder %v67, 1
    %v69 = vsel %vm68, %v66, 1.0
    %v70 = vrot.slane %v65, 7
    %v71 = vsel %vm68, %v70, 0.0
    %v72 = vmul.f32 %v64, %v71
    %v73 = vadd.f32 %v72, %v65
    %v74 = vmul.f32 %v64, %v69
    %v75 = vrot.slane %v74, 6
    %v76 = vsel %vm59, 1, 0
    %vm77 = vcmp.eq.s32.totalorder %v76, 1
    %v78 = vsel %vm77, %v75, 1.0
    %v79 = vrot.slane %v73, 6
    %v80 = vsel %vm77, %v79, 0.0
    %v81 = vmul.f32 %v74, %v80
    %v82 = vadd.f32 %v81, %v73
    %v83 = vmul.f32 %v74, %v78
    %v84 = vrot.slane %v83, 4
    %v85 = vsel %vm60, 1, 0
    %vm86 = vcmp.eq.s32.totalorder %v85, 1
    %v87 = vsel %vm86, %v84, 1.0
    %v88 = vrot.slane %v82, 4
    %v89 = vsel %vm86, %v88, 0.0
    %v90 = vmul.f32 %v83, %v89
    %v91 = vadd.f32 %v90, %v82
    %v92 = vmul.f32 %v83, %v87
    %v94 = vlaneseq
    %v95 = vshrl.u32 %v94, 7
    %v96 = vsub.s32 0, %v95
    %v97 = vrot.slane %v61, %v96
    %v99 = vmul.f32 %v92, %v97
    %v100 = vadd.f32 %v99, %v91
    %101 = vst [vmem:[#allocation9] sm:$0xff] %v100
    %v102 = vld [vmem:[#allocation9 + $0x7] sm:$0x1]
    %103 = vst [vmem:[#allocation2] sm:$0x1] %v102
    // Predicated region
    $region30: #{tpu_custom_call.1} parent=1 // pred_check
      _
    $region31: #{tpu_custom_call.1} parent=1 // pred_check_branch
      %105 = sbr.rel (0) target = $region33
    $region32: #{tpu_custom_call.1} parent=1 // pred_region
      %s107 = ssub.s32 128, 128
      %108 = vsyncadd [#allocation5], %s107
      %s110 = sshll.u32 [#allocation9], 4
      %s111 = int_to_ptr.vmem [resolvable:$true] %s110
      %113 = dma.vmem_to_hbm [thread:$0]  %s111, 128, %s3, [#allocation5]
    $region33: #{tpu_custom_call.1} parent=1 // pred_fallthru
      _
    // Predicated region
    $region34: #{tpu_custom_call.1} parent=1 // pred_check
      _
    $region35: #{tpu_custom_call.1} parent=1 // pred_check_branch
      %115 = sbr.rel (0) target = $region37
    $region36: #{tpu_custom_call.1} parent=1 // pred_region
      %116 = dma.done [#allocation5], 128
    $region37: #{tpu_custom_call.1} parent=1 // pred_fallthru
      _
    %117 = vsyncpa [#allocation4], 1
    %118 = vsyncpa [#allocation7], 1
    %119 = vsyncpa [#allocation5], 1

</llo_original>
